<compile_context>
chip_gen: v5e
topology: v5e:2x2
jax: 0.10.0
libtpu: 0.0.40
codegen_flags: <defaults>
</compile_context>

<pallas_src>
import functools

import jax
import jax.numpy as jnp
from jax.experimental import pallas as pl
from jax.experimental.pallas import tpu as pltpu


def dwconv_kernel(x_ref, w_ref, b_ref, o_ref, *, H, C):
    # x_ref : (R, L) tile; R = batch_block*H image rows, L = W*C (lane axis)
    # w_ref : (9, L) per-tap weights, row k = kh*3+kw, column-edge lanes of
    #         the kw=0 / kw=2 rows pre-zeroed on the host
    # b_ref : (1, L) bias tiled W times
    # o_ref : (R, L) output tile
    R, L = x_ref.shape
    x = x_ref[...].astype(jnp.float32)

    # (R, 1) row-within-image index: only needed to zero rows that wrap
    # across image/batch boundaries under the sublane rolls (conv padding=0).
    row_in_img = jax.lax.broadcasted_iota(jnp.int32, (R, 1), 0) % H
    not_top = row_in_img >= 1          # dh = -1 stays inside the image
    not_bot = row_in_img <= H - 2      # dh = +1 stays inside the image

    w = w_ref[...].astype(jnp.float32)                               # (9, L)
    acc = jnp.broadcast_to(b_ref[...].astype(jnp.float32), (R, L))   # bias

    zero = jnp.float32(0.0)
    for kh in range(3):
        # Build the row-shifted base inside the loop so only x, acc and one
        # shifted copy are live at a time (low vreg pressure, no spills).
        if kh == 0:
            base = jnp.where(not_top, pltpu.roll(x, 1, 0), zero)      # x[r-1]
        elif kh == 1:
            base = x
        else:
            base = jnp.where(not_bot, pltpu.roll(x, R - 1, 0), zero)  # x[r+1]
        # Column taps: lane rolls by +/-C.  Lanes that wrap across the image
        # row are multiplied by pre-zeroed weights -> no in-kernel lane mask.
        acc = acc + pltpu.roll(base, C, 1) * w[kh * 3 + 0:kh * 3 + 1, :]      # dw=-1
        acc = acc + base * w[kh * 3 + 1:kh * 3 + 2, :]                        # dw= 0
        acc = acc + pltpu.roll(base, L - C, 1) * w[kh * 3 + 2:kh * 3 + 3, :]  # dw=+1

    o_ref[...] = acc.astype(o_ref.dtype)


def prepare_dwconv_params(weight, bias, W):
    """One-time (per layer) host-side weight prep.

    weight: (C, 1, 3, 3) PyTorch depthwise layout; bias: (C,).
    Returns (w_tiled (9, W*C), b_tiled (1, W*C)) with the dw=+/-1 column
    boundary masks folded into the weights.
    """
    C = weight.shape[0]
    L = W * C
    w9 = jnp.transpose(weight[:, 0, :, :], (1, 2, 0)).reshape(9, C)   # k = kh*3+kw
    w_tiled = jnp.tile(w9, (1, W))                                    # (9, L)
    lane = jnp.arange(L)[None, :]
    kw_idx = (jnp.arange(9) % 3)[:, None]
    keep = jnp.ones((9, L), w_tiled.dtype)
    keep = jnp.where((kw_idx == 0) & (lane < C), 0, keep)        # left edge, dw=-1
    keep = jnp.where((kw_idx == 2) & (lane >= L - C), 0, keep)   # right edge, dw=+1
    w_tiled = w_tiled * keep
    b_tiled = jnp.tile(bias, W).reshape(1, L)
    return w_tiled, b_tiled


def _pick_batch_block(B, H, bytes_per_image, target_bytes=1 << 20):
    """Largest divisor of B whose tile stays under target_bytes, gives >= 2
    grid steps (pipelining + both v7x TCs) and satisfies the (8,128) sublane
    constraint; falls back gracefully otherwise."""
    divisors = [d for d in range(1, B + 1) if B % d == 0]
    valid = [d for d in divisors if d == B or (d * H) % 8 == 0]
    good = [d for d in valid
            if d * bytes_per_image <= target_bytes and (B // d >= 2 or B == 1)]
    if good:
        return max(good)
    multi = [d for d in valid if B // d >= 2 or B == 1]
    if multi:
        return min(multi)
    return B


def dwconv_apply(x, w_tiled, b_tiled, H, W):
    """x: (B, N, C) with N == H*W; w_tiled/b_tiled from prepare_dwconv_params.
    Returns (B, N, C)."""
    B, N, C = x.shape
    assert N == H * W
    L = W * C
    assert L % 128 == 0, "W*C must be a multiple of 128 for the lane-dense layout"

    # (B, N, C) row-major over N = H*W  ==  (B, H, W, C)  ==  (B*H, W*C).
    x2 = x.reshape(B * H, L)

    bytes_per_image = H * L * x.dtype.itemsize
    batch_block = _pick_batch_block(B, H, bytes_per_image)
    grid = (B // batch_block,)
    r_blk = batch_block * H

    # Explicit VMEM accounting: double-buffered in/out tiles, ~6-8 full-tile
    # f32 temporaries in the body, weight/bias tiles, plus headroom.  Capped
    # at 32 MiB so it is safe on v5e/v6e (128 MiB physical) and v7x (64 MiB).
    tile_f32 = r_blk * L * 4
    est_vmem = 4 * r_blk * L * x.dtype.itemsize + 8 * tile_f32 + 12 * L * 4
    vmem_limit = int(min(max(2 * est_vmem, 8 << 20), 32 << 20))

    out2 = pl.pallas_call(
        functools.partial(dwconv_kernel, H=H, C=C),
        out_shape=jax.ShapeDtypeStruct((B * H, L), x.dtype),
        grid_spec=pltpu.PrefetchScalarGridSpec(
            num_scalar_prefetch=0,
            grid=grid,
            in_specs=[
                pl.BlockSpec((r_blk, L), lambda i: (i, 0)),
                pl.BlockSpec((9, L), lambda i: (0, 0)),
                pl.BlockSpec((1, L), lambda i: (0, 0)),
            ],
            out_specs=pl.BlockSpec((r_blk, L), lambda i: (i, 0)),
        ),
        compiler_params=pltpu.CompilerParams(
            dimension_semantics=("parallel",),
            vmem_limit_bytes=vmem_limit),
    )(x2, w_tiled, b_tiled)

    return out2.reshape(B, N, C)


def dwconv(x, weight, bias, H, W):
    """Convenience wrapper (prep + apply)."""
    w_tiled, b_tiled = prepare_dwconv_params(weight, bias, W)
    return dwconv_apply(x, w_tiled, b_tiled, H, W)


def dwconv_reference(x, weight, bias, H, W):
    """Pure-JAX reference (same math, NHWC) for validation."""
    B, N, C = x.shape
    x_nhwc = x.reshape(B, H, W, C).astype(jnp.float32)
    w_k = jnp.transpose(weight[:, 0, :, :], (1, 2, 0)).astype(jnp.float32)
    xp = jnp.pad(x_nhwc, ((0, 0), (1, 1), (1, 1), (0, 0)))
    out = jnp.broadcast_to(bias.astype(jnp.float32), (B, H, W, C))
    for kh in range(3):
        for kw in range(3):
            out = out + xp[:, kh:kh + H, kw:kw + W, :] * w_k[kh, kw, :]
    return out.reshape(B, N, C).astype(x.dtype)


if __name__ == "__main__":
    # Small shapes consistent with the forward: dim(C)=32, H=W=16, B=2, N=H*W.
    B, C, H, W = 2, 32, 16, 16
    N = H * W

    key = jax.random.PRNGKey(0)
    kx, kw, kb = jax.random.split(key, 3)

    x = jax.random.normal(kx, (B, N, C), dtype=jnp.float32)
    # nn.Conv2d(dim, dim, 3, groups=dim) weight shape: (C, 1, 3, 3)
    fan_in = 1 * 3 * 3
    bound = 1.0 / (fan_in ** 0.5)
    weight = jax.random.uniform(kw, (C, 1, 3, 3), jnp.float32, -bound, bound)
    bias = jax.random.uniform(kb, (C,), jnp.float32, -bound, bound)

    # Hoist the weight tiling/masking out of the per-call path (once per layer),
    # and jit the apply so it runs as a single compiled computation.
    w_tiled, b_tiled = prepare_dwconv_params(weight, bias, W)
    apply_fn = jax.jit(dwconv_apply, static_argnames=("H", "W"))

    out = apply_fn(x, w_tiled, b_tiled, H=H, W=W)
    out = jax.block_until_ready(out)

    ref = dwconv_reference(x, weight, bias, H, W)
    assert out.shape == (B, N, C)
    assert jnp.allclose(out, ref, atol=1e-5, rtol=1e-5), "mismatch vs reference"

    print("KERNEL_OK")
</pallas_src>

<mosaic_0001>
module attributes {stable_mosaic.version = 11 : i64} {
  func.func @dwconv_kernel(%arg0: i32, %arg1: memref<16x512xf32, #tpu.memory_space<vmem>>, %arg2: memref<9x512xf32, #tpu.memory_space<vmem>>, %arg3: memref<1x512xf32, #tpu.memory_space<vmem>>, %arg4: memref<16x512xf32, #tpu.memory_space<vmem>>) attributes {dimension_semantics = [#tpu.dimension_semantics<parallel>], iteration_bounds = array<i64: 2>, scalar_prefetch = 0 : i64, scratch_operands = 0 : i64, tpu.core_type = #tpu.core_type<tc>, window_params = [{transform_indices = @transform_0, window_bounds = array<i64: 16, 512>}, {pipeline_mode = #tpu.pipeline_mode<synchronous>, transform_indices = @transform_1, window_bounds = array<i64: 9, 512>}, {pipeline_mode = #tpu.pipeline_mode<synchronous>, transform_indices = @transform_2, window_bounds = array<i64: 1, 512>}, {transform_indices = @transform_3, window_bounds = array<i64: 16, 512>}]} {
    %c0 = arith.constant 0 : index
    %c0_0 = arith.constant 0 : index
    %0 = vector.load %arg1[%c0, %c0_0] : memref<16x512xf32, #tpu.memory_space<vmem>>, vector<16x512xf32>
    %1 = tpu.iota {dimensions = array<i32: 0>} : vector<16x1xi32>
    %c16_i32 = arith.constant 16 : i32
    %c0_i32 = arith.constant 0 : i32
    %2 = arith.cmpi eq, %c16_i32, %c0_i32 : i32
    %c1_i32 = arith.constant 1 : i32
    %3 = arith.select %2, %c1_i32, %c16_i32 : i32
    %4 = vector.broadcast %3 : i32 to vector<16x1xi32>
    %5 = arith.remsi %1, %4 : vector<16x1xi32>
    %c0_i32_1 = arith.constant 0 : i32
    %6 = vector.broadcast %c0_i32_1 : i32 to vector<16x1xi32>
    %7 = arith.cmpi ne, %5, %6 : vector<16x1xi32>
    %c0_i32_2 = arith.constant 0 : i32
    %8 = vector.broadcast %c0_i32_2 : i32 to vector<16x1xi32>
    %9 = arith.cmpi slt, %5, %8 : vector<16x1xi32>
    %c0_i32_3 = arith.constant 0 : i32
    %10 = arith.cmpi slt, %3, %c0_i32_3 : i32
    %11 = vector.broadcast %10 : i1 to vector<16x1xi1>
    %12 = vector.broadcast %11 : vector<16x1xi1> to vector<16x1xi1>
    %13 = arith.xori %9, %12 : vector<16x1xi1>
    %14 = arith.andi %13, %7 : vector<16x1xi1>
    %15 = vector.broadcast %3 : i32 to vector<16x1xi32>
    %16 = arith.addi %5, %15 : vector<16x1xi32>
    %17 = arith.select %14, %16, %5 : vector<16x1xi1>, vector<16x1xi32>
    %c1_i32_4 = arith.constant 1 : i32
    %18 = vector.broadcast %c1_i32_4 : i32 to vector<16x1xi32>
    %19 = arith.cmpi sge, %17, %18 : vector<16x1xi32>
    %c14_i32 = arith.constant 14 : i32
    %20 = vector.broadcast %c14_i32 : i32 to vector<16x1xi32>
    %21 = arith.cmpi sle, %17, %20 : vector<16x1xi32>
    %c0_5 = arith.constant 0 : index
    %c0_6 = arith.constant 0 : index
    %22 = vector.load %arg2[%c0_5, %c0_6] : memref<9x512xf32, #tpu.memory_space<vmem>>, vector<9x512xf32>
    %c0_7 = arith.constant 0 : index
    %c0_8 = arith.constant 0 : index
    %23 = vector.load %arg3[%c0_7, %c0_8] : memref<1x512xf32, #tpu.memory_space<vmem>>, vector<1x512xf32>
    %24 = vector.shape_cast %23 : vector<1x512xf32> to vector<1x512xf32>
    %25 = vector.broadcast %24 : vector<1x512xf32> to vector<16x512xf32>
    %c1_i32_9 = arith.constant 1 : i32
    %26 = tpu.dynamic_rotate %0 by %c1_i32_9 dim 0 : vector<16x512xf32>, i32 -> vector<16x512xf32>
    %cst = arith.constant 0.000000e+00 : f32
    %27 = vector.shape_cast %19 : vector<16x1xi1> to vector<16x1xi1>
    %28 = vector.broadcast %27 : vector<16x1xi1> to vector<16x512xi1>
    %29 = vector.broadcast %cst : f32 to vector<16x512xf32>
    %30 = arith.select %28, %26, %29 : vector<16x512xi1>, vector<16x512xf32>
    %c32_i32 = arith.constant 32 : i32
    %31 = tpu.dynamic_rotate %30 by %c32_i32 dim 1 : vector<16x512xf32>, i32 -> vector<16x512xf32>
    %32 = vector.extract_strided_slice %22 {offsets = [0, 0], sizes = [1, 512], strides = [1, 1]} : vector<9x512xf32> to vector<1x512xf32>
    %33 = vector.broadcast %32 : vector<1x512xf32> to vector<16x512xf32>
    %34 = arith.mulf %31, %33 : vector<16x512xf32>
    %35 = arith.addf %25, %34 : vector<16x512xf32>
    %36 = vector.extract_strided_slice %22 {offsets = [1, 0], sizes = [1, 512], strides = [1, 1]} : vector<9x512xf32> to vector<1x512xf32>
    %37 = vector.broadcast %36 : vector<1x512xf32> to vector<16x512xf32>
    %38 = arith.mulf %30, %37 : vector<16x512xf32>
    %39 = arith.addf %35, %38 : vector<16x512xf32>
    %c480_i32 = arith.constant 480 : i32
    %40 = tpu.dynamic_rotate %30 by %c480_i32 dim 1 : vector<16x512xf32>, i32 -> vector<16x512xf32>
    %41 = vector.extract_strided_slice %22 {offsets = [2, 0], sizes = [1, 512], strides = [1, 1]} : vector<9x512xf32> to vector<1x512xf32>
    %42 = vector.broadcast %41 : vector<1x512xf32> to vector<16x512xf32>
    %43 = arith.mulf %40, %42 : vector<16x512xf32>
    %44 = arith.addf %39, %43 : vector<16x512xf32>
    %c32_i32_10 = arith.constant 32 : i32
    %45 = tpu.dynamic_rotate %0 by %c32_i32_10 dim 1 : vector<16x512xf32>, i32 -> vector<16x512xf32>
    %46 = vector.extract_strided_slice %22 {offsets = [3, 0], sizes = [1, 512], strides = [1, 1]} : vector<9x512xf32> to vector<1x512xf32>
    %47 = vector.broadcast %46 : vector<1x512xf32> to vector<16x512xf32>
    %48 = arith.mulf %45, %47 : vector<16x512xf32>
    %49 = arith.addf %44, %48 : vector<16x512xf32>
    %50 = vector.extract_strided_slice %22 {offsets = [4, 0], sizes = [1, 512], strides = [1, 1]} : vector<9x512xf32> to vector<1x512xf32>
    %51 = vector.broadcast %50 : vector<1x512xf32> to vector<16x512xf32>
    %52 = arith.mulf %0, %51 : vector<16x512xf32>
    %53 = arith.addf %49, %52 : vector<16x512xf32>
    %c480_i32_11 = arith.constant 480 : i32
    %54 = tpu.dynamic_rotate %0 by %c480_i32_11 dim 1 : vector<16x512xf32>, i32 -> vector<16x512xf32>
    %55 = vector.extract_strided_slice %22 {offsets = [5, 0], sizes = [1, 512], strides = [1, 1]} : vector<9x512xf32> to vector<1x512xf32>
    %56 = vector.broadcast %55 : vector<1x512xf32> to vector<16x512xf32>
    %57 = arith.mulf %54, %56 : vector<16x512xf32>
    %58 = arith.addf %53, %57 : vector<16x512xf32>
    %c15_i32 = arith.constant 15 : i32
    %59 = tpu.dynamic_rotate %0 by %c15_i32 dim 0 : vector<16x512xf32>, i32 -> vector<16x512xf32>
    %cst_12 = arith.constant 0.000000e+00 : f32
    %60 = vector.shape_cast %21 : vector<16x1xi1> to vector<16x1xi1>
    %61 = vector.broadcast %60 : vector<16x1xi1> to vector<16x512xi1>
    %62 = vector.broadcast %cst_12 : f32 to vector<16x512xf32>
    %63 = arith.select %61, %59, %62 : vector<16x512xi1>, vector<16x512xf32>
    %c32_i32_13 = arith.constant 32 : i32
    %64 = tpu.dynamic_rotate %63 by %c32_i32_13 dim 1 : vector<16x512xf32>, i32 -> vector<16x512xf32>
    %65 = vector.extract_strided_slice %22 {offsets = [6, 0], sizes = [1, 512], strides = [1, 1]} : vector<9x512xf32> to vector<1x512xf32>
    %66 = vector.broadcast %65 : vector<1x512xf32> to vector<16x512xf32>
    %67 = arith.mulf %64, %66 : vector<16x512xf32>
    %68 = arith.addf %58, %67 : vector<16x512xf32>
    %69 = vector.extract_strided_slice %22 {offsets = [7, 0], sizes = [1, 512], strides = [1, 1]} : vector<9x512xf32> to vector<1x512xf32>
    %70 = vector.broadcast %69 : vector<1x512xf32> to vector<16x512xf32>
    %71 = arith.mulf %63, %70 : vector<16x512xf32>
    %72 = arith.addf %68, %71 : vector<16x512xf32>
    %c480_i32_14 = arith.constant 480 : i32
    %73 = tpu.dynamic_rotate %63 by %c480_i32_14 dim 1 : vector<16x512xf32>, i32 -> vector<16x512xf32>
    %74 = vector.extract_strided_slice %22 {offsets = [8, 0], sizes = [1, 512], strides = [1, 1]} : vector<9x512xf32> to vector<1x512xf32>
    %75 = vector.broadcast %74 : vector<1x512xf32> to vector<16x512xf32>
    %76 = arith.mulf %73, %75 : vector<16x512xf32>
    %77 = arith.addf %72, %76 : vector<16x512xf32>
    %c0_15 = arith.constant 0 : index
    %c0_16 = arith.constant 0 : index
    %78 = vector.load %arg4[%c0_15, %c0_16] : memref<16x512xf32, #tpu.memory_space<vmem>>, vector<16x512xf32>
    tpu.vector_store %arg4[%c0_15, %c0_16], %77 {strides = array<i32>} : memref<16x512xf32, #tpu.memory_space<vmem>>, vector<16x512xf32>,
    return
  }
  func.func @transform_0(%arg0: i32) -> (i32, i32) {
    %c0_i32 = arith.constant 0 : i32
    %c0_i32_0 = arith.constant 0 : i32
    return %arg0, %c0_i32 : i32, i32
  }
  func.func @transform_1(%arg0: i32) -> (i32, i32) {
    %c0_i32 = arith.constant 0 : i32
    %c0_i32_0 = arith.constant 0 : i32
    %c0_i32_1 = arith.constant 0 : i32
    return %c0_i32, %c0_i32_0 : i32, i32
  }
  func.func @transform_2(%arg0: i32) -> (i32, i32) {
    %c0_i32 = arith.constant 0 : i32
    %c0_i32_0 = arith.constant 0 : i32
    %c0_i32_1 = arith.constant 0 : i32
    return %c0_i32, %c0_i32_0 : i32, i32
  }
  func.func @transform_3(%arg0: i32) -> (i32, i32) {
    %c0_i32 = arith.constant 0 : i32
    %c0_i32_0 = arith.constant 0 : i32
    return %arg0, %c0_i32 : i32, i32
  }
}

</mosaic_0001>

<llo_original>
// kernel: dwconv_apply.1
$region0: #{dwconv_apply.1}
  #allocation0 [shape = 'u32[]', space=smem, size = 0x4, offset = 0x4, fixed_abs, tag = 'smem constant byte address 0x4 - core index']
  #allocation1 [shape = 'u32[72,128]{1,0:T(1,128)}', space=vmem, size = 0x9000, scoped, tag = 'internal scratch']
  %s0 = inlined_call_operand.vmem [shape: f32[32,512], index: 0, kind: input, shape index: {}]
  %s1 = inlined_call_operand.vmem [shape: f32[9,512], index: 1, kind: input, shape index: {}]
  %s2 = inlined_call_operand.vmem [shape: f32[1,512], index: 2, kind: input, shape index: {}]
  %s3 = inlined_call_operand.vmem [shape: f32[32,512], index: 3, kind: output, shape index: {}]
  %s4 = sld [smem:[#allocation0]]
  $region45: #{dwconv_apply.1} parent=0
    _
  %s6 = ssub.s32 1, %s4
  %s7 = scalar_select 0, %s6, %s4
  loop: start=0, step=1, limit=4
  $region2: #{dwconv_apply.1} parent=0 // loop_pre_header
    _
  $region3: #{dwconv_apply.1} parent=0 // loop_header
    %s9 = sphi 0, %s13
    %p10 = scmp.ge.s32.totalorder %s9, 4
    %s19 = sphi 0, %s21
    %s22 = sphi 0, %s19
    %s23 = sphi 0, %s22
    %s39 = sphi 0, %s23
    %s43 = sphi 0, %s43
    %s45 = sphi 0, %s43
    %s46 = sphi 0, %s45
    %s60 = sphi 0, %s46
    %s64 = sphi 0, %s64
    %s66 = sphi 0, %s64
    %s67 = sphi 0, %s66
    %s81 = sphi 0, %s67
    %s87 = sphi 0, %s89
    %s90 = sphi 0, %s87
    %s91 = sphi 0, %s90
    %s107 = sphi 0, %s91
  $region4: #{dwconv_apply.1} parent=0 // loop_header_branch
    %12 = sbr.rel (%p10) target = $region8
  $region5: #{dwconv_apply.1} parent=0 // loop_body
    %s14 = ssub.s32 %s9, 1
    %s15 = ssub.s32 %s9, 2
    %s16 = sadd.s32 %s9, 1
    %s17 = ssub.s32 %s9, %s16
    %p18 = scmp.eq.s32.totalorder %s17, 0
    %s20 = sadd.s32 %s19, 1
    %s21 = scalar_select %p18, %s19, %s20
    %p24 = pneg %p18
    %p25 = scmp.eq.s32.totalorder %s9, 1
    %p26 = por %p24, %p25
    %p27 = scmp.ne.s32.totalorder %s19, %s22
    %p28 = scmp.eq.s32.totalorder %s9, 0
    %p29 = por %p27, %p28
    %p30 = scmp.ne.s32.totalorder %s19, %s22
    %p31 = scmp.eq.s32.totalorder %s14, 1
    %p32 = por %p30, %p31
    %p33 = scmp.ne.s32.totalorder %s22, %s23
    %p34 = scmp.eq.s32.totalorder %s14, 0
    %p35 = por %p33, %p34
    %p36 = scmp.ne.s32.totalorder %s22, %s23
    %p37 = scmp.eq.s32.totalorder %s15, 1
    %p38 = por %p36, %p37
    %p40 = scmp.ne.s32.totalorder %s23, %s39
    %p41 = scmp.eq.s32.totalorder %s15, 0
    %p42 = por %p40, %p41
    %s44 = sadd.s32 %s43, 1
    %p47 = scmp.eq.s32.totalorder %s9, 1
    %p48 = scmp.ne.s32.totalorder %s43, %s45
    %p49 = scmp.eq.s32.totalorder %s9, 0
    %p50 = por %p48, %p49
    %p51 = scmp.ne.s32.totalorder %s43, %s45
    %p52 = scmp.eq.s32.totalorder %s14, 1
    %p53 = por %p51, %p52
    %p54 = scmp.ne.s32.totalorder %s45, %s46
    %p55 = scmp.eq.s32.totalorder %s14, 0
    %p56 = por %p54, %p55
    %p57 = scmp.ne.s32.totalorder %s45, %s46
    %p58 = scmp.eq.s32.totalorder %s15, 1
    %p59 = por %p57, %p58
    %p61 = scmp.ne.s32.totalorder %s46, %s60
    %p62 = scmp.eq.s32.totalorder %s15, 0
    %p63 = por %p61, %p62
    %s65 = sadd.s32 %s64, 1
    %p68 = scmp.eq.s32.totalorder %s9, 1
    %p69 = scmp.ne.s32.totalorder %s64, %s66
    %p70 = scmp.eq.s32.totalorder %s9, 0
    %p71 = por %p69, %p70
    %p72 = scmp.ne.s32.totalorder %s64, %s66
    %p73 = scmp.eq.s32.totalorder %s14, 1
    %p74 = por %p72, %p73
    %p75 = scmp.ne.s32.totalorder %s66, %s67
    %p76 = scmp.eq.s32.totalorder %s14, 0
    %p77 = por %p75, %p76
    %p78 = scmp.ne.s32.totalorder %s66, %s67
    %p79 = scmp.eq.s32.totalorder %s15, 1
    %p80 = por %p78, %p79
    %p82 = scmp.ne.s32.totalorder %s67, %s81
    %p83 = scmp.eq.s32.totalorder %s15, 0
    %p84 = por %p82, %p83
    %s85 = ssub.s32 %s9, %s16
    %p86 = scmp.eq.s32.totalorder %s85, 0
    %s88 = sadd.s32 %s87, 1
    %s89 = scalar_select %p86, %s87, %s88
    %p92 = pneg %p86
    %p93 = scmp.eq.s32.totalorder %s9, 1
    %p94 = por %p92, %p93
    %p95 = scmp.ne.s32.totalorder %s87, %s90
    %p96 = scmp.eq.s32.totalorder %s9, 0
    %p97 = por %p95, %p96
    %p98 = scmp.ne.s32.totalorder %s87, %s90
    %p99 = scmp.eq.s32.totalorder %s14, 1
    %p100 = por %p98, %p99
    %p101 = scmp.ne.s32.totalorder %s90, %s91
    %p102 = scmp.eq.s32.totalorder %s14, 0
    %p103 = por %p101, %p102
    %p104 = scmp.ne.s32.totalorder %s90, %s91
    %p105 = scmp.eq.s32.totalorder %s15, 1
    %p106 = por %p104, %p105
    %p108 = scmp.ne.s32.totalorder %s91, %s107
    %p109 = scmp.eq.s32.totalorder %s15, 0
    %p110 = por %p108, %p109
    %p111 = scmp.le.s32.totalorder 1, %s9
    %p112 = scmp.lt.s32.totalorder %s9, 3
    %p113 = pnand %p111, %p112
    %p114 = pneg %p113
    // Predicated region
    $region9: #{dwconv_apply.1} parent=5 // pred_check
      _
    $region10: #{dwconv_apply.1} parent=5 // pred_check_branch
      %116 = sbr.rel (%p113) target = $region12
    $region11: #{dwconv_apply.1} parent=5 // pred_region
      %s117 = ssub.s32 %s9, 1
      // Predicated region
      $region13: #{dwconv_apply.1} parent=11 // pred_check
        %p118 = pneg %p56
      $region14: #{dwconv_apply.1} parent=11 // pred_check_branch
        %120 = sbr.rel (%p118) target = $region16
      $region15: #{dwconv_apply.1} parent=11 // pred_region
        _
      $region16: #{dwconv_apply.1} parent=11 // pred_fallthru
        _
      // Predicated region
      $region17: #{dwconv_apply.1} parent=11 // pred_check
        %p121 = pneg %p77
      $region18: #{dwconv_apply.1} parent=11 // pred_check_branch
        %123 = sbr.rel (%p121) target = $region20
      $region19: #{dwconv_apply.1} parent=11 // pred_region
        _
      $region20: #{dwconv_apply.1} parent=11 // pred_fallthru
        _
    $region12: #{dwconv_apply.1} parent=5 // pred_fallthru
      _
    %p124 = scmp.lt.s32.totalorder %s9, 2
    // Predicated region
    $region21: #{dwconv_apply.1} parent=5 // pred_check
      %p125 = pneg %p124
    $region22: #{dwconv_apply.1} parent=5 // pred_check_branch
      %127 = sbr.rel (%p125) target = $region24
    $region23: #{dwconv_apply.1} parent=5 // pred_region
      // Predicated region
      $region25: #{dwconv_apply.1} parent=23 // pred_check
        %p128 = pneg %p29
      $region26: #{dwconv_apply.1} parent=23 // pred_check_branch
        %130 = sbr.rel (%p128) target = $region28
      $region27: #{dwconv_apply.1} parent=23 // pred_region
        %s131 = smul.u32 2, %s9
        %p132 = scmp.lt.s32.totalorder %s131, 3
        %s133 = scalar_select %p132, %s131, 3
        %s134 = smul.addr %s133, 4
        %s135 = smul.addr %s134, 8
        %s136 = scalar_lea.vmem %s0, %s135
        %s137 = smul.u32 2, %s9
      $region28: #{dwconv_apply.1} parent=23 // pred_fallthru
        _
    $region24: #{dwconv_apply.1} parent=5 // pred_fallthru
      _
    %p138 = scmp.le.s32.totalorder 1, %s9
    %p139 = scmp.lt.s32.totalorder %s9, 3
    %p140 = pnand %p138, %p139
    %p141 = pneg %p140
    // Predicated region
    $region29: #{dwconv_apply.1} parent=5 // pred_check
      _
    $region30: #{dwconv_apply.1} parent=5 // pred_check_branch
      %143 = sbr.rel (%p140) target = $region32
    $region31: #{dwconv_apply.1} parent=5 // pred_region
      %s144 = ssub.s32 %s9, 1
      %s145 = smul.u32 2, %s14
      %p146 = scmp.lt.s32.totalorder %s145, 3
      %s147 = scalar_select %p146, %s145, 3
      %s148 = smul.addr %s147, 4
      %s149 = smul.addr %s148, 8
      %s150 = scalar_lea.vmem %s0, %s149
      %p151 = pneg %p35
      %p152 = pneg %p32
      %p153 = pneg %p56
      %p154 = pneg %p53
      %p155 = pneg %p77
      %p156 = pneg %p74
      %p157 = pneg %p103
      %p158 = pneg %p100
      %s159 = smul.u32 2, %s14
      %p160 = scmp.lt.s32.totalorder %s159, 3
      %s161 = scalar_select %p160, %s159, 3
      %s162 = smul.addr %s161, 4
      %s163 = smul.addr %s162, 8
      %s164 = scalar_lea.vmem %s3, %s163
      %s165 = smul.u32 2, %s14
      %p166 = scmp.lt.s32.totalorder %s165, 3
      %s167 = scalar_select %p166, %s165, 3
      %s168 = smul.addr %s167, 4
      %s169 = smul.addr %s168, 8
      %s170 = scalar_lea.vmem %s0, %s169
      %s171 = smul.u32 2, %s14
      %s172 = smul.u32 2, %s14
      %p173 = scmp.lt.s32.totalorder %s172, 3
      %s174 = scalar_select %p173, %s172, 3
      %s175 = smul.addr %s174, 4
      %s176 = smul.addr %s175, 8
      %s177 = scalar_lea.vmem %s3, %s176
      %s178 = smul.u32 2, %s14
      %v179 = vld [vmem:[%s170] sm:$0xff]
      %v180 = vld [vmem:[%s170 + $0x8] sm:$0xff]
      %v181 = vld [vmem:[%s170 + $0x10] sm:$0xff]
      %v182 = vld [vmem:[%s170 + $0x18] sm:$0xff]
      %v183 = vld [vmem:[%s170 + $0x20] sm:$0xff]
      %v184 = vld [vmem:[%s170 + $0x28] sm:$0xff]
      %v185 = vld [vmem:[%s170 + $0x30] sm:$0xff]
      %v186 = vld [vmem:[%s170 + $0x38] sm:$0xff]
      %v187 = vlaneseq
      %v188 = vshrl.u32 %v187, 7
      %v189 = vadd.s32 %v188, 8
      %vm190 = vcmp.lt.s32.totalorder %v188, 0
      %v191 = vsub.s32 0, %v188
      %v192 = vsel %vm190, %v191, %v188
      %v193 = vshrl.u32 %v192, 4
      %v194 = vand.u32 %v192, 15
      %v195 = vsub.s32 0, %v194
      %v196 = vsel %vm190, %v195, %v194
      %vm197 = vcmp.lt.s32.totalorder %v189, 0
      %v198 = vsub.s32 0, %v189
      %v199 = vsel %vm197, %v198, %v189
      %v200 = vshrl.u32 %v199, 4
      %v201 = vand.u32 %v199, 15
      %v202 = vsub.s32 0, %v201
      %v203 = vsel %vm197, %v202, %v201
      %vm204 = vcmp.ne.s32.totalorder %v196, 0
      %vm205 = vcmp.ne.s32.totalorder %v203, 0
      %vm206 = vcmp.lt.s32.totalorder %v196, 0
      %vm207 = vcmp.lt.s32.totalorder %v203, 0
      %vm208 = vmand %vm206, %vm204
      %vm209 = vmand %vm207, %vm205
      %v210 = vadd.s32 %v196, 16
      %v211 = vadd.s32 %v203, 16
      %v212 = vsel %vm208, %v210, %v196
      %v213 = vsel %vm209, %v211, %v203
      %vm214 = vcmp.ge.s32.totalorder %v212, 1
      %vm215 = vcmp.ge.s32.totalorder %v213, 1
      %vm216 = vcmp.le.s32.totalorder %v212, 14
      %vm217 = vcmp.le.s32.totalorder %v213, 14
      %v218 = vld [vmem:[%s1] sm:$0xff]
      %v219 = vld [vmem:[%s1 + $0x8] sm:$0xff]
      %v220 = vld [vmem:[%s1 + $0x10] sm:$0xff]
      %v221 = vld [vmem:[%s1 + $0x18] sm:$0xff]
      %v222 = vld [vmem:[%s1 + $0x20] sm:$0x1]
      %v223 = vld [vmem:[%s1 + $0x28] sm:$0x1]
      %v224 = vld [vmem:[%s1 + $0x30] sm:$0x1]
      %v225 = vld [vmem:[%s1 + $0x38] sm:$0x1]
      %v226 = vld [vmem:[%s2] sm:$0xf]
      %v228 = vperm.slane %v226, 0
      %v229 = vperm.slane %v226, 1
      %v230 = vperm.slane %v226, 2
      %v231 = vperm.slane %v226, 3
      %v236 = vrot.slane %v179, 7
      %v237 = vrot.slane %v180, 7
      %v238 = vrot.slane %v181, 7
      %v239 = vrot.slane %v182, 7
      %v240 = vrot.slane %v183, 7
      %v241 = vrot.slane %v184, 7
      %v242 = vrot.slane %v185, 7
      %v243 = vrot.slane %v186, 7
      %vm244 = vcmp.lt.s32.totalorder %v188, 1
      %v245 = vsel %vm244, %v236, %v240
      %v246 = vsel %vm244, %v237, %v241
      %v247 = vsel %vm244, %v238, %v242
      %v248 = vsel %vm244, %v239, %v243
      %v249 = vsel %vm244, %v240, %v236
      %v250 = vsel %vm244, %v241, %v237
      %v251 = vsel %vm244, %v242, %v238
      %v252 = vsel %vm244, %v243, %v239
      %v253 = vsel %vm214, 1, 0
      %v254 = vsel %vm215, 1, 0
      %vm255 = vcmp.eq.s32.totalorder %v253, 1
      %vm256 = vcmp.eq.s32.totalorder %v254, 1
      %v257 = vsel %vm255, %v249, 0.0
      %v258 = vsel %vm255, %v250, 0.0
      %v259 = vsel %vm255, %v251, 0.0
      %v260 = vsel %vm255, %v252, 0.0
      %v261 = vsel %vm256, %v245, 0.0
      %v262 = vsel %vm256, %v246, 0.0
      %v263 = vsel %vm256, %v247, 0.0
      %v264 = vsel %vm256, %v248, 0.0
      %265 = vrot.lane.b32.xlu0 %v257, 32
      %v266 = vpop.permute.xlu0 %265
      %267 = vrot.lane.b32.xlu0 %v261, 32
      %v268 = vpop.permute.xlu0 %267
      %269 = vrot.lane.b32.xlu0 %v258, 32
      %v270 = vpop.permute.xlu0 %269
      %271 = vrot.lane.b32.xlu0 %v262, 32
      %v272 = vpop.permute.xlu0 %271
      %273 = vrot.lane.b32.xlu0 %v259, 32
      %v274 = vpop.permute.xlu0 %273
      %275 = vrot.lane.b32.xlu0 %v263, 32
      %v276 = vpop.permute.xlu0 %275
      %277 = vrot.lane.b32.xlu0 %v260, 32
      %v278 = vpop.permute.xlu0 %277
      %279 = vrot.lane.b32.xlu0 %v264, 32
      %v280 = vpop.permute.xlu0 %279
      %v281 = vlaneseq
      %v282 = vand.u32 %v281, 127
      %vm283 = vcmp.lt.s32.totalorder %v282, 32
      %v284 = vsel %vm283, %v274, %v278
      %v285 = vsel %vm283, %v276, %v280
      %v286 = vsel %vm283, %v270, %v274
      %v287 = vsel %vm283, %v272, %v276
      %v288 = vsel %vm283, %v266, %v270
      %v289 = vsel %vm283, %v268, %v272
      %v290 = vsel %vm283, %v278, %v266
      %v291 = vsel %vm283, %v280, %v268
      %v292 = vperm.slane %v218, 0
      %v293 = vperm.slane %v219, 0
      %v294 = vperm.slane %v220, 0
      %v295 = vperm.slane %v221, 0
      %v296 = vmul.f32 %v290, %v292
      %v297 = vmul.f32 %v288, %v293
      %v298 = vmul.f32 %v286, %v294
      %v299 = vmul.f32 %v284, %v295
      %v300 = vmul.f32 %v291, %v292
      %v301 = vmul.f32 %v289, %v293
      %v302 = vmul.f32 %v287, %v294
      %v303 = vmul.f32 %v285, %v295
      %v304 = vadd.f32 %v228, %v296
      %v305 = vadd.f32 %v229, %v297
      %v306 = vadd.f32 %v230, %v298
      %v307 = vadd.f32 %v231, %v299
      %v308 = vadd.f32 %v228, %v300
      %v309 = vadd.f32 %v229, %v301
      %v310 = vadd.f32 %v230, %v302
      %v311 = vadd.f32 %v231, %v303
      %v312 = vperm.slane %v218, 1
      %v313 = vperm.slane %v219, 1
      %v314 = vperm.slane %v220, 1
      %v315 = vperm.slane %v221, 1
      %v316 = vmul.f32 %v257, %v312
      %v317 = vmul.f32 %v258, %v313
      %v318 = vmul.f32 %v259, %v314
      %v319 = vmul.f32 %v260, %v315
      %v320 = vmul.f32 %v261, %v312
      %v321 = vmul.f32 %v262, %v313
      %v322 = vmul.f32 %v263, %v314
      %v323 = vmul.f32 %v264, %v315
      %v324 = vadd.f32 %v304, %v316
      %v325 = vadd.f32 %v305, %v317
      %v326 = vadd.f32 %v306, %v318
      %v327 = vadd.f32 %v307, %v319
      %v328 = vadd.f32 %v308, %v320
      %v329 = vadd.f32 %v309, %v321
      %v330 = vadd.f32 %v310, %v322
      %v331 = vadd.f32 %v311, %v323
      %332 = vrot.lane.b32.xlu0 %v257, 96
      %v333 = vpop.permute.xlu0 %332
      %334 = vrot.lane.b32.xlu0 %v261, 96
      %v335 = vpop.permute.xlu0 %334
      %336 = vrot.lane.b32.xlu0 %v258, 96
      %v337 = vpop.permute.xlu0 %336
      %338 = vrot.lane.b32.xlu0 %v262, 96
      %v339 = vpop.permute.xlu0 %338
      %340 = vrot.lane.b32.xlu0 %v259, 96
      %v341 = vpop.permute.xlu0 %340
      %342 = vrot.lane.b32.xlu0 %v263, 96
      %v343 = vpop.permute.xlu0 %342
      %344 = vrot.lane.b32.xlu0 %v260, 96
      %v345 = vpop.permute.xlu0 %344
      %346 = vrot.lane.b32.xlu0 %v264, 96
      %v347 = vpop.permute.xlu0 %346
      %vm348 = vcmp.lt.s32.totalorder %v282, 96
      %v349 = vsel %vm348, %v341, %v345
      %v350 = vsel %vm348, %v343, %v347
      %v351 = vsel %vm348, %v337, %v341
      %v352 = vsel %vm348, %v339, %v343
      %v353 = vsel %vm348, %v333, %v337
      %v354 = vsel %vm348, %v335, %v339
      %v355 = vsel %vm348, %v345, %v333
      %v356 = vsel %vm348, %v347, %v335
      %v357 = vperm.slane %v218, 2
      %v358 = vperm.slane %v219, 2
      %v359 = vperm.slane %v220, 2
      %v360 = vperm.slane %v221, 2
      %v361 = vmul.f32 %v353, %v357
      %v362 = vmul.f32 %v351, %v358
      %v363 = vmul.f32 %v349, %v359
      %v364 = vmul.f32 %v355, %v360
      %v365 = vmul.f32 %v354, %v357
      %v366 = vmul.f32 %v352, %v358
      %v367 = vmul.f32 %v350, %v359
      %v368 = vmul.f32 %v356, %v360
      %v369 = vadd.f32 %v324, %v361
      %v370 = vadd.f32 %v325, %v362
      %v371 = vadd.f32 %v326, %v363
      %v372 = vadd.f32 %v327, %v364
      %v373 = vadd.f32 %v328, %v365
      %v374 = vadd.f32 %v329, %v366
      %v375 = vadd.f32 %v330, %v367
      %v376 = vadd.f32 %v331, %v368
      %377 = vrot.lane.b32.xlu0 %v179, 32
      %v378 = vpop.permute.xlu0 %377
      %379 = vrot.lane.b32.xlu0 %v183, 32
      %v380 = vpop.permute.xlu0 %379
      %381 = vrot.lane.b32.xlu0 %v180, 32
      %v382 = vpop.permute.xlu0 %381
      %383 = vrot.lane.b32.xlu0 %v184, 32
      %v384 = vpop.permute.xlu0 %383
      %385 = vrot.lane.b32.xlu0 %v181, 32
      %v386 = vpop.permute.xlu0 %385
      %387 = vrot.lane.b32.xlu0 %v185, 32
      %v388 = vpop.permute.xlu0 %387
      %389 = vrot.lane.b32.xlu0 %v182, 32
      %v390 = vpop.permute.xlu0 %389
      %391 = vrot.lane.b32.xlu0 %v186, 32
      %v392 = vpop.permute.xlu0 %391
      %v393 = vsel %vm283, %v386, %v390
      %v394 = vsel %vm283, %v388, %v392
      %v395 = vsel %vm283, %v382, %v386
      %v396 = vsel %vm283, %v384, %v388
      %v397 = vsel %vm283, %v378, %v382
      %v398 = vsel %vm283, %v380, %v384
      %v399 = vsel %vm283, %v390, %v378
      %v400 = vsel %vm283, %v392, %v380
      %v401 = vperm.slane %v218, 3
      %v402 = vperm.slane %v219, 3
      %v403 = vperm.slane %v220, 3
      %v404 = vperm.slane %v221, 3
      %v405 = vmul.f32 %v399, %v401
      %v406 = vmul.f32 %v397, %v402
      %v407 = vmul.f32 %v395, %v403
      %v408 = vmul.f32 %v393, %v404
      %v409 = vmul.f32 %v400, %v401
      %v410 = vmul.f32 %v398, %v402
      %v411 = vmul.f32 %v396, %v403
      %v412 = vmul.f32 %v394, %v404
      %v413 = vadd.f32 %v369, %v405
      %v414 = vadd.f32 %v370, %v406
      %v415 = vadd.f32 %v371, %v407
      %v416 = vadd.f32 %v372, %v408
      %v417 = vadd.f32 %v373, %v409
      %v418 = vadd.f32 %v374, %v410
      %v419 = vadd.f32 %v375, %v411
      %v420 = vadd.f32 %v376, %v412
      %v421 = vperm.slane %v218, 4
      %v422 = vperm.slane %v219, 4
      %v423 = vperm.slane %v220, 4
      %v424 = vperm.slane %v221, 4
      %v425 = vmul.f32 %v179, %v421
      %v426 = vmul.f32 %v180, %v422
      %v427 = vmul.f32 %v181, %v423
      %v428 = vmul.f32 %v182, %v424
      %v429 = vmul.f32 %v183, %v421
      %v430 = vmul.f32 %v184, %v422
      %v431 = vmul.f32 %v185, %v423
      %v432 = vmul.f32 %v186, %v424
      %v433 = vadd.f32 %v413, %v425
      %v434 = vadd.f32 %v414, %v426
      %v435 = vadd.f32 %v415, %v427
      %v436 = vadd.f32 %v416, %v428
      %v437 = vadd.f32 %v417, %v429
      %v438 = vadd.f32 %v418, %v430
      %v439 = vadd.f32 %v419, %v431
      %v440 = vadd.f32 %v420, %v432
      %441 = vrot.lane.b32.xlu0 %v179, 96
      %v442 = vpop.permute.xlu0 %441
      %443 = vrot.lane.b32.xlu0 %v183, 96
      %v444 = vpop.permute.xlu0 %443
      %445 = vrot.lane.b32.xlu0 %v180, 96
      %v446 = vpop.permute.xlu0 %445
      %447 = vrot.lane.b32.xlu0 %v184, 96
      %v448 = vpop.permute.xlu0 %447
      %449 = vrot.lane.b32.xlu0 %v181, 96
      %v450 = vpop.permute.xlu0 %449
      %451 = vrot.lane.b32.xlu0 %v185, 96
      %v452 = vpop.permute.xlu0 %451
      %453 = vrot.lane.b32.xlu0 %v182, 96
      %v454 = vpop.permute.xlu0 %453
      %455 = vrot.lane.b32.xlu0 %v186, 96
      %v456 = vpop.permute.xlu0 %455
      %v457 = vsel %vm348, %v450, %v454
      %v458 = vsel %vm348, %v452, %v456
      %v459 = vsel %vm348, %v446, %v450
      %v460 = vsel %vm348, %v448, %v452
      %v461 = vsel %vm348, %v442, %v446
      %v462 = vsel %vm348, %v444, %v448
      %v463 = vsel %vm348, %v454, %v442
      %v464 = vsel %vm348, %v456, %v444
      %v465 = vperm.slane %v218, 5
      %v466 = vperm.slane %v219, 5
      %v467 = vperm.slane %v220, 5
      %v468 = vperm.slane %v221, 5
      %v469 = vmul.f32 %v461, %v465
      %v470 = vmul.f32 %v459, %v466
      %v471 = vmul.f32 %v457, %v467
      %v472 = vmul.f32 %v463, %v468
      %v473 = vmul.f32 %v462, %v465
      %v474 = vmul.f32 %v460, %v466
      %v475 = vmul.f32 %v458, %v467
      %v476 = vmul.f32 %v464, %v468
      %v477 = vadd.f32 %v433, %v469
      %v478 = vadd.f32 %v434, %v470
      %v479 = vadd.f32 %v435, %v471
      %v480 = vadd.f32 %v436, %v472
      %v481 = vadd.f32 %v437, %v473
      %v482 = vadd.f32 %v438, %v474
      %v483 = vadd.f32 %v439, %v475
      %v484 = vadd.f32 %v440, %v476
      %v485 = vrot.slane %v179, 1
      %v486 = vrot.slane %v180, 1
      %v487 = vrot.slane %v181, 1
      %v488 = vrot.slane %v182, 1
      %v489 = vrot.slane %v183, 1
      %v490 = vrot.slane %v184, 1
      %v491 = vrot.slane %v185, 1
      %v492 = vrot.slane %v186, 1
      %vm493 = vcmp.lt.s32.totalorder %v188, 7
      %v494 = vsel %vm493, %v485, %v489
      %v495 = vsel %vm493, %v486, %v490
      %v496 = vsel %vm493, %v487, %v491
      %v497 = vsel %vm493, %v488, %v492
      %v498 = vsel %vm493, %v489, %v485
      %v499 = vsel %vm493, %v490, %v486
      %v500 = vsel %vm493, %v491, %v487
      %v501 = vsel %vm493, %v492, %v488
      %v502 = vsel %vm216, 1, 0
      %v503 = vsel %vm217, 1, 0
      %vm504 = vcmp.eq.s32.totalorder %v502, 1
      %vm505 = vcmp.eq.s32.totalorder %v503, 1
      %v506 = vsel %vm504, %v494, 0.0
      %v507 = vsel %vm504, %v495, 0.0
      %v508 = vsel %vm504, %v496, 0.0
      %v509 = vsel %vm504, %v497, 0.0
      %v510 = vsel %vm505, %v498, 0.0
      %v511 = vsel %vm505, %v499, 0.0
      %v512 = vsel %vm505, %v500, 0.0
      %v513 = vsel %vm505, %v501, 0.0
      %514 = vrot.lane.b32.xlu0 %v506, 32
      %v515 = vpop.permute.xlu0 %514
      %516 = vrot.lane.b32.xlu0 %v510, 32
      %v517 = vpop.permute.xlu0 %516
      %518 = vrot.lane.b32.xlu0 %v507, 32
      %v519 = vpop.permute.xlu0 %518
      %520 = vrot.lane.b32.xlu0 %v511, 32
      %v521 = vpop.permute.xlu0 %520
      %522 = vrot.lane.b32.xlu0 %v508, 32
      %v523 = vpop.permute.xlu0 %522
      %524 = vrot.lane.b32.xlu0 %v512, 32
      %v525 = vpop.permute.xlu0 %524
      %526 = vrot.lane.b32.xlu0 %v509, 32
      %v527 = vpop.permute.xlu0 %526
      %528 = vrot.lane.b32.xlu0 %v513, 32
      %v529 = vpop.permute.xlu0 %528
      %v530 = vsel %vm283, %v523, %v527
      %v531 = vsel %vm283, %v525, %v529
      %v532 = vsel %vm283, %v519, %v523
      %v533 = vsel %vm283, %v521, %v525
      %v534 = vsel %vm283, %v515, %v519
      %v535 = vsel %vm283, %v517, %v521
      %v536 = vsel %vm283, %v527, %v515
      %v537 = vsel %vm283, %v529, %v517
      %v538 = vperm.slane %v218, 6
      %v539 = vperm.slane %v219, 6
      %v540 = vperm.slane %v220, 6
      %v541 = vperm.slane %v221, 6
      %v542 = vmul.f32 %v536, %v538
      %v543 = vmul.f32 %v534, %v539
      %v544 = vmul.f32 %v532, %v540
      %v545 = vmul.f32 %v530, %v541
      %v546 = vmul.f32 %v537, %v538
      %v547 = vmul.f32 %v535, %v539
      %v548 = vmul.f32 %v533, %v540
      %v549 = vmul.f32 %v531, %v541
      %v550 = vadd.f32 %v477, %v542
      %v551 = vadd.f32 %v478, %v543
      %v552 = vadd.f32 %v479, %v544
      %v553 = vadd.f32 %v480, %v545
      %v554 = vadd.f32 %v481, %v546
      %v555 = vadd.f32 %v482, %v547
      %v556 = vadd.f32 %v483, %v548
      %v557 = vadd.f32 %v484, %v549
      %v558 = vperm.slane %v218, 7
      %v559 = vperm.slane %v219, 7
      %v560 = vperm.slane %v220, 7
      %v561 = vperm.slane %v221, 7
      %v562 = vmul.f32 %v506, %v558
      %v563 = vmul.f32 %v507, %v559
      %v564 = vmul.f32 %v508, %v560
      %v565 = vmul.f32 %v509, %v561
      %v566 = vmul.f32 %v510, %v558
      %v567 = vmul.f32 %v511, %v559
      %v568 = vmul.f32 %v512, %v560
      %v569 = vmul.f32 %v513, %v561
      %v570 = vadd.f32 %v550, %v562
      %v571 = vadd.f32 %v551, %v563
      %v572 = vadd.f32 %v552, %v564
      %v573 = vadd.f32 %v553, %v565
      %v574 = vadd.f32 %v554, %v566
      %v575 = vadd.f32 %v555, %v567
      %v576 = vadd.f32 %v556, %v568
      %v577 = vadd.f32 %v557, %v569
      %578 = vrot.lane.b32.xlu0 %v506, 96
      %v579 = vpop.permute.xlu0 %578
      %580 = vrot.lane.b32.xlu0 %v510, 96
      %v581 = vpop.permute.xlu0 %580
      %582 = vrot.lane.b32.xlu0 %v507, 96
      %v583 = vpop.permute.xlu0 %582
      %584 = vrot.lane.b32.xlu0 %v511, 96
      %v585 = vpop.permute.xlu0 %584
      %586 = vrot.lane.b32.xlu0 %v508, 96
      %v587 = vpop.permute.xlu0 %586
      %588 = vrot.lane.b32.xlu0 %v512, 96
      %v589 = vpop.permute.xlu0 %588
      %590 = vrot.lane.b32.xlu0 %v509, 96
      %v591 = vpop.permute.xlu0 %590
      %592 = vrot.lane.b32.xlu0 %v513, 96
      %v593 = vpop.permute.xlu0 %592
      %v594 = vsel %vm348, %v587, %v591
      %v595 = vsel %vm348, %v589, %v593
      %v596 = vsel %vm348, %v583, %v587
      %v597 = vsel %vm348, %v585, %v589
      %v598 = vsel %vm348, %v579, %v583
      %v599 = vsel %vm348, %v581, %v585
      %v600 = vsel %vm348, %v591, %v579
      %v601 = vsel %vm348, %v593, %v581
      %v602 = vperm.slane %v222, 0
      %v603 = vperm.slane %v223, 0
      %v604 = vperm.slane %v224, 0
      %v605 = vperm.slane %v225, 0
      %v606 = vmul.f32 %v598, %v602
      %v607 = vmul.f32 %v596, %v603
      %v608 = vmul.f32 %v594, %v604
      %v609 = vmul.f32 %v600, %v605
      %v610 = vmul.f32 %v599, %v602
      %v611 = vmul.f32 %v597, %v603
      %v612 = vmul.f32 %v595, %v604
      %v613 = vmul.f32 %v601, %v605
      %v614 = vadd.f32 %v570, %v606
      %v615 = vadd.f32 %v571, %v607
      %v616 = vadd.f32 %v572, %v608
      %v617 = vadd.f32 %v573, %v609
      %v618 = vadd.f32 %v574, %v610
      %v619 = vadd.f32 %v575, %v611
      %v620 = vadd.f32 %v576, %v612
      %v621 = vadd.f32 %v577, %v613
      %622 = vst [vmem:[%s177] sm:$0xff] %v614
      %623 = vst [vmem:[%s177 + $0x8] sm:$0xff] %v615
      %624 = vst [vmem:[%s177 + $0x10] sm:$0xff] %v616
      %625 = vst [vmem:[%s177 + $0x18] sm:$0xff] %v617
      %626 = vst [vmem:[%s177 + $0x20] sm:$0xff] %v618
      %627 = vst [vmem:[%s177 + $0x28] sm:$0xff] %v619
      %628 = vst [vmem:[%s177 + $0x30] sm:$0xff] %v620
      %629 = vst [vmem:[%s177 + $0x38] sm:$0xff] %v621
      %s630 = smul.u32 2, %s14
      %p631 = scmp.lt.s32.totalorder %s630, 3
      %s632 = scalar_select %p631, %s630, 3
      %s633 = smul.addr %s632, 4
      %s634 = smul.addr %s633, 8
      %s635 = scalar_lea.vmem %s3, %s634
      // Predicated region
      $region33: #{dwconv_apply.1} parent=31 // pred_check
        %p636 = pneg %p100
      $region34: #{dwconv_apply.1} parent=31 // pred_check_branch
        %638 = sbr.rel (%p636) target = $region36
      $region35: #{dwconv_apply.1} parent=31 // pred_region
        %s639 = smul.u32 2, %s14
      $region36: #{dwconv_apply.1} parent=31 // pred_fallthru
        _
    $region32: #{dwconv_apply.1} parent=5 // pred_fallthru
      _
    %p640 = scmp.le.s32.totalorder 2, %s9
    // Predicated region
    $region37: #{dwconv_apply.1} parent=5 // pred_check
      %p641 = pneg %p640
    $region38: #{dwconv_apply.1} parent=5 // pred_check_branch
      %643 = sbr.rel (%p641) target = $region40
    $region39: #{dwconv_apply.1} parent=5 // pred_region
      %s644 = ssub.s32 %s9, 2
      // Predicated region
      $region41: #{dwconv_apply.1} parent=39 // pred_check
        %p645 = pneg %p106
      $region42: #{dwconv_apply.1} parent=39 // pred_check_branch
        %647 = sbr.rel (%p645) target = $region44
      $region43: #{dwconv_apply.1} parent=39 // pred_region
        %s648 = smul.u32 2, %s15
        %p649 = scmp.lt.s32.totalorder %s648, 3
        %s650 = scalar_select %p649, %s648, 3
        %s651 = smul.addr %s650, 4
        %s652 = smul.addr %s651, 8
        %s653 = scalar_lea.vmem %s3, %s652
      $region44: #{dwconv_apply.1} parent=39 // pred_fallthru
        _
    $region40: #{dwconv_apply.1} parent=5 // pred_fallthru
      _
  $region6: #{dwconv_apply.1} parent=0 // loop_footer
    %s13 = sadd.s32 1, %s9
  $region7: #{dwconv_apply.1} parent=0 // loop_footer_branch
    %8 = sbr.rel target = $region3
  $region8: #{dwconv_apply.1} parent=0 // loop_exit
    _

</llo_original>
